<compile_context>
chip_gen: v5e
topology: v5e:2x2
jax: 0.10.0
libtpu: 0.0.40
codegen_flags: <defaults>
</compile_context>

<pallas_src>
import jax
import jax.numpy as jnp
from jax.experimental import pallas as pl
from jax.experimental.pallas import tpu as pltpu

LANE = 128            # TPU vreg lane width
SUBLANE = 16          # round batch tiles to 16 rows (bf16 sublane packing)
SMALL_BATCH = 256     # at/below this, a single batch block (grid=(1,))
MAX_BATCH_TILE = 4096 # per-step batch tile for large B (~10 MiB VMEM, fine on all gens)


def _round_up(x, m):
    return (x + m - 1) // m * m


def fcnn_kernel(x_ref, w1_ref, b1_ref, w2_ref, b2_ref, w3_ref, b3_ref, o_ref):
    # x streamed as f32; cast to bf16 on the VPU right before the MXU.
    x = x_ref[...].astype(jnp.bfloat16)
    # Layer 1: Linear + ReLU. bf16 x bf16 -> f32 accumulate on MXU; bias/ReLU in f32.
    h1 = jnp.dot(x, w1_ref[...], preferred_element_type=jnp.float32)
    h1 = jnp.maximum(h1 + b1_ref[...], 0.0)
    # Layer 2: Linear + ReLU.
    h2 = jnp.dot(h1.astype(jnp.bfloat16), w2_ref[...],
                 preferred_element_type=jnp.float32)
    h2 = jnp.maximum(h2 + b2_ref[...], 0.0)
    # Layer 3: Linear (no activation). W3 is lane-padded to 128 columns for the MXU,
    # but only the real columns are written back: transpose (XLU) so batch becomes the
    # lane axis and keep the first out_dim rows -> lane-dense, unpadded f32 store.
    out = jnp.dot(h2.astype(jnp.bfloat16), w3_ref[...],
                  preferred_element_type=jnp.float32) + b3_ref[...]
    o_ref[...] = jnp.transpose(out)[:o_ref.shape[0], :].astype(o_ref.dtype)


def make_fcnn_forward(params):
    """Build a jitted forward(x). Weight padding / bf16 casting happens ONCE here.

    params: dict with w stored [in, out], b stored [1, out] (f32, unpadded).
    Zero padding is exact: padded hidden units compute ReLU(0+0)=0 and feed zero rows
    into the next layer; padded output columns are never stored.
    """
    w1, b1, w2, b2, w3, b3 = (params[k] for k in ("w1", "b1", "w2", "b2", "w3", "b3"))
    in_dim, hid = w1.shape
    out_dim = w3.shape[1]
    hid_p = _round_up(hid, LANE)
    out_p = _round_up(out_dim, LANE)

    pad2 = lambda a, r, c: jnp.pad(a, ((0, r - a.shape[0]), (0, c - a.shape[1])))
    w1p = pad2(w1, in_dim, hid_p).astype(jnp.bfloat16)
    b1p = pad2(b1, 1, hid_p).astype(jnp.float32)
    w2p = pad2(w2, hid_p, hid_p).astype(jnp.bfloat16)
    b2p = pad2(b2, 1, hid_p).astype(jnp.float32)
    w3p = pad2(w3, hid_p, out_p).astype(jnp.bfloat16)
    b3p = pad2(b3, 1, out_p).astype(jnp.float32)

    @jax.jit
    def forward(x):
        B = x.shape[0]

        # --- batch tiling (shapes are static under jit).
        if B <= SMALL_BATCH:
            tb = _round_up(B, SUBLANE)                               # single block
        else:
            # >= 2 blocks so v7x megacore can split the batch; tiles are multiples of
            # 128 so the (out_dim, tb) output blocks stay lane-dense.
            tb = min(MAX_BATCH_TILE, _round_up(-(-B // 2), LANE))
        b_pad = _round_up(B, tb)
        n_blocks = b_pad // tb
        xp = jnp.pad(x.astype(jnp.float32), ((0, b_pad - B), (0, 0)))

        # VMEM budget: double-buffered x/out tiles + resident weights + live f32
        # intermediates (h1/h2/out); capped with headroom below v7x's 64 MiB VMEM.
        tile_bytes = (
            2 * tb * in_dim * 4                                         # x tile (f32), 2 bufs
            + 2 * out_dim * tb * 4                                      # out tile (f32), 2 bufs
            + 2 * (in_dim * hid_p + hid_p * hid_p + hid_p * out_p) * 2  # weights (bf16)
            + 2 * (2 * hid_p + out_p) * 4                               # biases (f32)
            + 4 * tb * hid_p * 4                                        # live f32 intermediates
        )
        vmem_limit = int(min(max(2 * tile_bytes, 16 << 20), 48 << 20))

        flops = 2 * b_pad * (in_dim * hid_p + hid_p * hid_p + hid_p * out_p)
        bytes_accessed = (
            b_pad * in_dim * 4 + out_dim * b_pad * 4
            + (w1p.size + w2p.size + w3p.size) * 2
            + (b1p.size + b2p.size + b3p.size) * 4
        )

        # Constant index_map -> weights/biases stay VMEM-resident across grid steps.
        # TODO(synk): pipeline_mode=pl.Buffered(1) on these would save their (tiny)
        # second buffer; left at the default for lowering robustness.
        const = lambda shape: pl.BlockSpec(shape, lambda i: (0, 0))

        out_t = pl.pallas_call(
            fcnn_kernel,
            out_shape=jax.ShapeDtypeStruct((out_dim, b_pad), jnp.float32),
            grid=(n_blocks,),
            in_specs=[
                pl.BlockSpec((tb, in_dim), lambda i: (i, 0)),  # x: streamed over batch
                const(w1p.shape), const(b1p.shape),
                const(w2p.shape), const(b2p.shape),
                const(w3p.shape), const(b3p.shape),
            ],
            out_specs=pl.BlockSpec((out_dim, tb), lambda i: (0, i)),
            compiler_params=pltpu.CompilerParams(
                dimension_semantics=("parallel",),   # batch blocks split across TCs (v7x)
                vmem_limit_bytes=vmem_limit,
            ),
            cost_estimate=pl.CostEstimate(
                flops=flops, transcendentals=0, bytes_accessed=bytes_accessed),
        )(xp, w1p, b1p, w2p, b2p, w3p, b3p)

        return jnp.transpose(out_t[:, :B])           # (B, out_dim), f32

    return forward


def init_params(key, input_dim, hidden_dim=64, output_dim=1):
    """Mimics PyTorch's default Linear init (uniform +/- 1/sqrt(fan_in)); w is [in, out]."""
    ks = jax.random.split(key, 6)

    def linear(kw, kb, fan_in, fan_out):
        bound = 1.0 / jnp.sqrt(fan_in)
        w = jax.random.uniform(kw, (fan_in, fan_out), jnp.float32, -bound, bound)
        b = jax.random.uniform(kb, (1, fan_out), jnp.float32, -bound, bound)
        return w, b

    w1, b1 = linear(ks[0], ks[1], input_dim, hidden_dim)
    w2, b2 = linear(ks[2], ks[3], hidden_dim, hidden_dim)
    w3, b3 = linear(ks[4], ks[5], hidden_dim, output_dim)
    return dict(w1=w1, b1=b1, w2=w2, b2=b2, w3=w3, b3=b3)


def fcnn_reference(x, p):
    """Pure-JAX reference mirroring the kernel's dtype handling (bf16 operands, f32 acc)."""
    bf = lambda a: a.astype(jnp.bfloat16).astype(jnp.float32)
    h1 = jnp.maximum(bf(x) @ bf(p["w1"]) + p["b1"], 0.0)
    h2 = jnp.maximum(bf(h1) @ bf(p["w2"]) + p["b2"], 0.0)
    return bf(h2) @ bf(p["w3"]) + p["b3"]


if __name__ == "__main__":
    key = jax.random.PRNGKey(0)
    k_x, k_p = jax.random.split(key)

    batch, input_dim, hidden_dim, output_dim = 8, 32, 64, 1
    params = init_params(k_p, input_dim, hidden_dim, output_dim)
    forward = make_fcnn_forward(params)

    # Small batch (single-block path).
    x = jax.random.normal(k_x, (batch, input_dim), jnp.float32)
    out = jax.block_until_ready(forward(x))
    ref = fcnn_reference(x, params)
    assert out.shape == (batch, output_dim)
    err = float(jnp.max(jnp.abs(out - ref)))
    assert jnp.allclose(out, ref, atol=2e-2, rtol=2e-2), f"max abs err {err}"

    # Larger, non-divisible batch (multi-block / megacore path).
    x2 = jax.random.normal(k_x, (300, input_dim), jnp.float32)
    out2 = jax.block_until_ready(forward(x2))
    ref2 = fcnn_reference(x2, params)
    assert out2.shape == (300, output_dim)
    err2 = float(jnp.max(jnp.abs(out2 - ref2)))
    assert jnp.allclose(out2, ref2, atol=2e-2, rtol=2e-2), f"max abs err {err2}"

    print("KERNEL_OK")
</pallas_src>

<mosaic_0001>
module attributes {stable_mosaic.version = 11 : i64} {
  func.func @fcnn_kernel(%arg0: i32, %arg1: memref<16x32xf32, #tpu.memory_space<vmem>>, %arg2: memref<32x128xbf16, #tpu.memory_space<vmem>>, %arg3: memref<1x128xf32, #tpu.memory_space<vmem>>, %arg4: memref<128x128xbf16, #tpu.memory_space<vmem>>, %arg5: memref<1x128xf32, #tpu.memory_space<vmem>>, %arg6: memref<128x128xbf16, #tpu.memory_space<vmem>>, %arg7: memref<1x128xf32, #tpu.memory_space<vmem>>, %arg8: memref<1x16xf32, #tpu.memory_space<vmem>>) attributes {dimension_semantics = [#tpu.dimension_semantics<parallel>], iteration_bounds = array<i64: 1>, scalar_prefetch = 0 : i64, scratch_operands = 0 : i64, tpu.core_type = #tpu.core_type<tc>, window_params = [{transform_indices = @transform_0, window_bounds = array<i64: 16, 32>}, {pipeline_mode = #tpu.pipeline_mode<synchronous>, transform_indices = @transform_1, window_bounds = array<i64: 32, 128>}, {pipeline_mode = #tpu.pipeline_mode<synchronous>, transform_indices = @transform_2, window_bounds = array<i64: 1, 128>}, {pipeline_mode = #tpu.pipeline_mode<synchronous>, transform_indices = @transform_3, window_bounds = array<i64: 128, 128>}, {pipeline_mode = #tpu.pipeline_mode<synchronous>, transform_indices = @transform_4, window_bounds = array<i64: 1, 128>}, {pipeline_mode = #tpu.pipeline_mode<synchronous>, transform_indices = @transform_5, window_bounds = array<i64: 128, 128>}, {pipeline_mode = #tpu.pipeline_mode<synchronous>, transform_indices = @transform_6, window_bounds = array<i64: 1, 128>}, {transform_indices = @transform_7, window_bounds = array<i64: 1, 16>}]} {
    %c0 = arith.constant 0 : index
    %c0_0 = arith.constant 0 : index
    %0 = vector.load %arg1[%c0, %c0_0] : memref<16x32xf32, #tpu.memory_space<vmem>>, vector<16x32xf32>
    %1 = arith.truncf %0 : vector<16x32xf32> to vector<16x32xbf16>
    %c0_1 = arith.constant 0 : index
    %c0_2 = arith.constant 0 : index
    %2 = vector.load %arg2[%c0_1, %c0_2] : memref<32x128xbf16, #tpu.memory_space<vmem>>, vector<32x128xbf16>
    %cst = arith.constant dense<0.000000e+00> : vector<16x128xf32>
    %3 = tpu.matmul %1, %2, %cst {dimension_numbers = #tpu.dot_dimension_numbers<[1], [0], [0], [1], [0, 0, 1, 1], [], []>} : vector<16x32xbf16>, vector<32x128xbf16>, vector<16x128xf32> -> vector<16x128xf32>
    %c0_3 = arith.constant 0 : index
    %c0_4 = arith.constant 0 : index
    %4 = vector.load %arg3[%c0_3, %c0_4] : memref<1x128xf32, #tpu.memory_space<vmem>>, vector<1x128xf32>
    %5 = vector.broadcast %4 : vector<1x128xf32> to vector<16x128xf32>
    %6 = arith.addf %3, %5 : vector<16x128xf32>
    %cst_5 = arith.constant 0.000000e+00 : f32
    %7 = vector.broadcast %cst_5 : f32 to vector<16x128xf32>
    %8 = arith.maximumf %6, %7 : vector<16x128xf32>
    %9 = arith.truncf %8 : vector<16x128xf32> to vector<16x128xbf16>
    %c0_6 = arith.constant 0 : index
    %c0_7 = arith.constant 0 : index
    %10 = vector.load %arg4[%c0_6, %c0_7] : memref<128x128xbf16, #tpu.memory_space<vmem>>, vector<128x128xbf16>
    %cst_8 = arith.constant dense<0.000000e+00> : vector<16x128xf32>
    %11 = tpu.matmul %9, %10, %cst_8 {dimension_numbers = #tpu.dot_dimension_numbers<[1], [0], [0], [1], [0, 0, 1, 1], [], []>} : vector<16x128xbf16>, vector<128x128xbf16>, vector<16x128xf32> -> vector<16x128xf32>
    %c0_9 = arith.constant 0 : index
    %c0_10 = arith.constant 0 : index
    %12 = vector.load %arg5[%c0_9, %c0_10] : memref<1x128xf32, #tpu.memory_space<vmem>>, vector<1x128xf32>
    %13 = vector.broadcast %12 : vector<1x128xf32> to vector<16x128xf32>
    %14 = arith.addf %11, %13 : vector<16x128xf32>
    %cst_11 = arith.constant 0.000000e+00 : f32
    %15 = vector.broadcast %cst_11 : f32 to vector<16x128xf32>
    %16 = arith.maximumf %14, %15 : vector<16x128xf32>
    %17 = arith.truncf %16 : vector<16x128xf32> to vector<16x128xbf16>
    %c0_12 = arith.constant 0 : index
    %c0_13 = arith.constant 0 : index
    %18 = vector.load %arg6[%c0_12, %c0_13] : memref<128x128xbf16, #tpu.memory_space<vmem>>, vector<128x128xbf16>
    %cst_14 = arith.constant dense<0.000000e+00> : vector<16x128xf32>
    %19 = tpu.matmul %17, %18, %cst_14 {dimension_numbers = #tpu.dot_dimension_numbers<[1], [0], [0], [1], [0, 0, 1, 1], [], []>} : vector<16x128xbf16>, vector<128x128xbf16>, vector<16x128xf32> -> vector<16x128xf32>
    %c0_15 = arith.constant 0 : index
    %c0_16 = arith.constant 0 : index
    %20 = vector.load %arg7[%c0_15, %c0_16] : memref<1x128xf32, #tpu.memory_space<vmem>>, vector<1x128xf32>
    %21 = vector.broadcast %20 : vector<1x128xf32> to vector<16x128xf32>
    %22 = arith.addf %19, %21 : vector<16x128xf32>
    %23 = tpu.transpose %22, [1, 0] : vector<16x128xf32> -> vector<128x16xf32>
    %24 = vector.extract_strided_slice %23 {offsets = [0, 0], sizes = [1, 16], strides = [1, 1]} : vector<128x16xf32> to vector<1x16xf32>
    %c0_17 = arith.constant 0 : index
    %c0_18 = arith.constant 0 : index
    %25 = vector.load %arg8[%c0_17, %c0_18] : memref<1x16xf32, #tpu.memory_space<vmem>>, vector<1x16xf32>
    tpu.vector_store %arg8[%c0_17, %c0_18], %24 {strides = array<i32>} : memref<1x16xf32, #tpu.memory_space<vmem>>, vector<1x16xf32>,
    return
  }
  func.func @transform_0(%arg0: i32) -> (i32, i32) {
    %c0_i32 = arith.constant 0 : i32
    %c0_i32_0 = arith.constant 0 : i32
    return %arg0, %c0_i32 : i32, i32
  }
  func.func @transform_1(%arg0: i32) -> (i32, i32) {
    %c0_i32 = arith.constant 0 : i32
    %c0_i32_0 = arith.constant 0 : i32
    %c0_i32_1 = arith.constant 0 : i32
    return %c0_i32, %c0_i32_0 : i32, i32
  }
  func.func @transform_2(%arg0: i32) -> (i32, i32) {
    %c0_i32 = arith.constant 0 : i32
    %c0_i32_0 = arith.constant 0 : i32
    %c0_i32_1 = arith.constant 0 : i32
    return %c0_i32, %c0_i32_0 : i32, i32
  }
  func.func @transform_3(%arg0: i32) -> (i32, i32) {
    %c0_i32 = arith.constant 0 : i32
    %c0_i32_0 = arith.constant 0 : i32
    %c0_i32_1 = arith.constant 0 : i32
    return %c0_i32, %c0_i32_0 : i32, i32
  }
  func.func @transform_4(%arg0: i32) -> (i32, i32) {
    %c0_i32 = arith.constant 0 : i32
    %c0_i32_0 = arith.constant 0 : i32
    %c0_i32_1 = arith.constant 0 : i32
    return %c0_i32, %c0_i32_0 : i32, i32
  }
  func.func @transform_5(%arg0: i32) -> (i32, i32) {
    %c0_i32 = arith.constant 0 : i32
    %c0_i32_0 = arith.constant 0 : i32
    %c0_i32_1 = arith.constant 0 : i32
    return %c0_i32, %c0_i32_0 : i32, i32
  }
  func.func @transform_6(%arg0: i32) -> (i32, i32) {
    %c0_i32 = arith.constant 0 : i32
    %c0_i32_0 = arith.constant 0 : i32
    %c0_i32_1 = arith.constant 0 : i32
    return %c0_i32, %c0_i32_0 : i32, i32
  }
  func.func @transform_7(%arg0: i32) -> (i32, i32) {
    %c0_i32 = arith.constant 0 : i32
    %c0_i32_0 = arith.constant 0 : i32
    return %c0_i32, %arg0 : i32, i32
  }
}

</mosaic_0001>

<llo_original>
// kernel: forward.1
$region0: #{forward.1}
  #allocation0 [shape = 'u32[]', space=smem, size = 0x4, offset = 0x4, fixed_abs, tag = 'smem constant byte address 0x4 - core index']
  #allocation1 [shape = 'u32[72,128]{1,0:T(1,128)}', space=vmem, size = 0x9000, scoped, tag = 'internal scratch']
  %s0 = inlined_call_operand.vmem [shape: f32[16,32], index: 0, kind: input, shape index: {}]
  %s1 = inlined_call_operand.vmem [shape: bf16[32,128], index: 1, kind: input, shape index: {}]
  %s2 = inlined_call_operand.vmem [shape: f32[1,128], index: 2, kind: input, shape index: {}]
  %s3 = inlined_call_operand.hbm [shape: bf16[128,128], index: 3, kind: input, shape index: {}]
  %s4 = inlined_call_operand.vmem [shape: f32[1,128], index: 4, kind: input, shape index: {}]
  %s5 = inlined_call_operand.hbm [shape: bf16[128,128], index: 5, kind: input, shape index: {}]
  %s6 = inlined_call_operand.vmem [shape: f32[1,128], index: 6, kind: input, shape index: {}]
  %s7 = inlined_call_operand.vmem [shape: f32[1,16], index: 7, kind: output, shape index: {}]
  %s8 = sld [smem:[#allocation0]]
  $region46: #{forward.1} parent=0
    _
  %s10 = ssub.s32 1, %s8
  %s11 = scalar_select 0, %s10, %s8
  $region1: #{forward.1} parent=0
    #allocation2 [shape = 'u8[32768]{0}', space=vmem, size = 0x8000, scoped, tag = 'input window, operand 3, single buffered']
    #allocation3 [shape = 's32[1]{0}', space=sflag, size = 0x4, scoped, tag = 'scoped memory for forward.1']
    #allocation4 [shape = 'u8[32768]{0}', space=vmem, size = 0x8000, scoped, tag = 'input window, operand 5, single buffered']
    #allocation5 [shape = 's32[1]{0}', space=sflag, size = 0x4, scoped, tag = 'scoped memory for forward.1']
    %12 = vsyncpa [#allocation3], 0
    %13 = vsyncpa [#allocation5], 0
    // Predicated region
    $region2: #{forward.1} parent=1 // pred_check
      _
    $region3: #{forward.1} parent=1 // pred_check_branch
      %15 = sbr.rel (0) target = $region5
    $region4: #{forward.1} parent=1 // pred_region
      _
    $region5: #{forward.1} parent=1 // pred_fallthru
      _
    // Predicated region
    $region6: #{forward.1} parent=1 // pred_check
      _
    $region7: #{forward.1} parent=1 // pred_check_branch
      %17 = sbr.rel (0) target = $region9
    $region8: #{forward.1} parent=1 // pred_region
      _
    $region9: #{forward.1} parent=1 // pred_fallthru
      _
    // Predicated region
    $region10: #{forward.1} parent=1 // pred_check
      _
    $region11: #{forward.1} parent=1 // pred_check_branch
      %19 = sbr.rel (0) target = $region13
    $region12: #{forward.1} parent=1 // pred_region
      _
    $region13: #{forward.1} parent=1 // pred_fallthru
      _
    // Predicated region
    $region14: #{forward.1} parent=1 // pred_check
      _
    $region15: #{forward.1} parent=1 // pred_check_branch
      %21 = sbr.rel (0) target = $region17
    $region16: #{forward.1} parent=1 // pred_region
      %23 = vsyncadd [#allocation3], 0
      %s24 = sshll.u32 %s3, 4
      %s25 = int_to_ptr.hbm [resolvable:$true] %s24
      %s26 = sshll.u32 [#allocation2], 4
      %s27 = int_to_ptr.vmem [resolvable:$true] %s26
      %32 = dma.hbm_to_vmem [thread:$0]  %s25, 1024, %s27, [#allocation3], 64, 64, 4
    $region17: #{forward.1} parent=1 // pred_fallthru
      _
    // Predicated region
    $region18: #{forward.1} parent=1 // pred_check
      _
    $region19: #{forward.1} parent=1 // pred_check_branch
      %34 = sbr.rel (0) target = $region21
    $region20: #{forward.1} parent=1 // pred_region
      _
    $region21: #{forward.1} parent=1 // pred_fallthru
      _
    // Predicated region
    $region22: #{forward.1} parent=1 // pred_check
      _
    $region23: #{forward.1} parent=1 // pred_check_branch
      %36 = sbr.rel (0) target = $region25
    $region24: #{forward.1} parent=1 // pred_region
      %38 = vsyncadd [#allocation5], 0
      %s39 = sshll.u32 %s5, 4
      %s40 = int_to_ptr.hbm [resolvable:$true] %s39
      %s41 = sshll.u32 [#allocation4], 4
      %s42 = int_to_ptr.vmem [resolvable:$true] %s41
      %47 = dma.hbm_to_vmem [thread:$0]  %s40, 1024, %s42, [#allocation5], 64, 64, 4
    $region25: #{forward.1} parent=1 // pred_fallthru
      _
    // Predicated region
    $region26: #{forward.1} parent=1 // pred_check
      _
    $region27: #{forward.1} parent=1 // pred_check_branch
      %49 = sbr.rel (0) target = $region29
    $region28: #{forward.1} parent=1 // pred_region
      _
    $region29: #{forward.1} parent=1 // pred_fallthru
      _
    // Predicated region
    $region30: #{forward.1} parent=1 // pred_check
      _
    $region31: #{forward.1} parent=1 // pred_check_branch
      %51 = sbr.rel (0) target = $region33
    $region32: #{forward.1} parent=1 // pred_region
      %53 = dma.done [#allocation3], 1024
    $region33: #{forward.1} parent=1 // pred_fallthru
      _
    // Predicated region
    $region34: #{forward.1} parent=1 // pred_check
      _
    $region35: #{forward.1} parent=1 // pred_check_branch
      %55 = sbr.rel (0) target = $region37
    $region36: #{forward.1} parent=1 // pred_region
      %57 = dma.done [#allocation5], 1024
    $region37: #{forward.1} parent=1 // pred_fallthru
      _
    %v59 = vld [vmem:[%s0] sm:$0xff]
    %v60 = vld [vmem:[%s0 + $0x8] sm:$0xff]
    %v61 = vpack.c.bf16 %v60, %v59
    %v62 = vld [vmem:[%s1] sm:$0xf]
    %v63 = vld [vmem:[%s1 + $0x4] sm:$0xf]
    %v64 = vld [vmem:[%s1 + $0x8] sm:$0xf]
    %v65 = vld [vmem:[%s1 + $0xc] sm:$0xf]
    %v66 = vld [vmem:[%s2] sm:$0x1]
    %v68 = vperm.slane %v66, 0
    %v74 = vunpack.c.l.b16 %v62
    %v75 = vunpack.c.l.b16 %v63
    %v76 = vunpack.c.l.b16 %v64
    %v77 = vunpack.c.l.b16 %v65
    %v78 = vpack.c.b16 %v75, %v74
    %v79 = vpack.c.b16 %v77, %v76
    %vm82 = vcmask 261120
    %v84 = vsel %vm82, %v61, 0
    %86 = vmatpush.bf16.msra.mxu0 0
    %87 = vmatpush.bf16.msra.mxu0 0
    %88 = vmatpush.bf16.msra.mxu0 0
    %89 = vmatpush.bf16.msra.mxu0 0
    %90 = vmatpush.bf16.msra.mxu0 0
    %91 = vmatpush.bf16.msra.mxu0 0
    %92 = vmatpush.bf16.msra.mxu0 %v79
    %93 = vmatpush.bf16.msra.mxu0 %v78
    %94 = vmatmul.bf16.gmra.mxu0 %v84
    %v95 = vpop.f32.mrf.mxu0
    %v96 = vadd.f32 %v68, %v95
    %v97 = vpop.f32.mrf.mxu0
    %v98 = vadd.f32 %v68, %v97
    %99 = vdwg.mxu0
    %v100 = vmax.f32 %v96, 0.0
    %v101 = vmax.f32 %v98, 0.0
    %v102 = vpack.c.bf16 %v101, %v100
    %v103 = vld [vmem:[#allocation2] sm:$0xf]
    %v104 = vld [vmem:[#allocation2 + $0x4] sm:$0xf]
    %v105 = vld [vmem:[#allocation2 + $0x8] sm:$0xf]
    %v106 = vld [vmem:[#allocation2 + $0xc] sm:$0xf]
    %v107 = vld [vmem:[#allocation2 + $0x10] sm:$0xf]
    %v108 = vld [vmem:[#allocation2 + $0x14] sm:$0xf]
    %v109 = vld [vmem:[#allocation2 + $0x18] sm:$0xf]
    %v110 = vld [vmem:[#allocation2 + $0x1c] sm:$0xf]
    %v111 = vld [vmem:[#allocation2 + $0x20] sm:$0xf]
    %v112 = vld [vmem:[#allocation2 + $0x24] sm:$0xf]
    %v113 = vld [vmem:[#allocation2 + $0x28] sm:$0xf]
    %v114 = vld [vmem:[#allocation2 + $0x2c] sm:$0xf]
    %v115 = vld [vmem:[#allocation2 + $0x30] sm:$0xf]
    %v116 = vld [vmem:[#allocation2 + $0x34] sm:$0xf]
    %v117 = vld [vmem:[#allocation2 + $0x38] sm:$0xf]
    %v118 = vld [vmem:[#allocation2 + $0x3c] sm:$0xf]
    %v119 = vld [vmem:[%s4] sm:$0x1]
    %v121 = vperm.slane %v119, 0
    %v139 = vunpack.c.l.b16 %v103
    %v140 = vunpack.c.l.b16 %v104
    %v141 = vunpack.c.l.b16 %v105
    %v142 = vunpack.c.l.b16 %v106
    %v143 = vunpack.c.l.b16 %v107
    %v144 = vunpack.c.l.b16 %v108
    %v145 = vunpack.c.l.b16 %v109
    %v146 = vunpack.c.l.b16 %v110
    %v147 = vunpack.c.l.b16 %v111
    %v148 = vunpack.c.l.b16 %v112
    %v149 = vunpack.c.l.b16 %v113
    %v150 = vunpack.c.l.b16 %v114
    %v151 = vunpack.c.l.b16 %v115
    %v152 = vunpack.c.l.b16 %v116
    %v153 = vunpack.c.l.b16 %v117
    %v154 = vunpack.c.l.b16 %v118
    %v155 = vpack.c.b16 %v140, %v139
    %v156 = vpack.c.b16 %v142, %v141
    %v157 = vpack.c.b16 %v144, %v143
    %v158 = vpack.c.b16 %v146, %v145
    %v159 = vpack.c.b16 %v148, %v147
    %v160 = vpack.c.b16 %v150, %v149
    %v161 = vpack.c.b16 %v152, %v151
    %v162 = vpack.c.b16 %v154, %v153
    %171 = vmatpush.bf16.msra.mxu0 %v162
    %172 = vmatpush.bf16.msra.mxu0 %v161
    %173 = vmatpush.bf16.msra.mxu0 %v160
    %174 = vmatpush.bf16.msra.mxu0 %v159
    %175 = vmatpush.bf16.msra.mxu0 %v158
    %176 = vmatpush.bf16.msra.mxu0 %v157
    %177 = vmatpush.bf16.msra.mxu0 %v156
    %178 = vmatpush.bf16.msra.mxu0 %v155
    %179 = vmatmul.bf16.gmra.mxu0 %v102
    %v180 = vpop.f32.mrf.mxu0
    %v181 = vadd.f32 %v121, %v180
    %v182 = vpop.f32.mrf.mxu0
    %v183 = vadd.f32 %v121, %v182
    %184 = vdwg.mxu0
    %v185 = vmax.f32 %v181, 0.0
    %v186 = vmax.f32 %v183, 0.0
    %v187 = vpack.c.bf16 %v186, %v185
    %v188 = vld [vmem:[#allocation4] sm:$0xf]
    %v189 = vld [vmem:[#allocation4 + $0x4] sm:$0xf]
    %v190 = vld [vmem:[#allocation4 + $0x8] sm:$0xf]
    %v191 = vld [vmem:[#allocation4 + $0xc] sm:$0xf]
    %v192 = vld [vmem:[#allocation4 + $0x10] sm:$0xf]
    %v193 = vld [vmem:[#allocation4 + $0x14] sm:$0xf]
    %v194 = vld [vmem:[#allocation4 + $0x18] sm:$0xf]
    %v195 = vld [vmem:[#allocation4 + $0x1c] sm:$0xf]
    %v196 = vld [vmem:[#allocation4 + $0x20] sm:$0xf]
    %v197 = vld [vmem:[#allocation4 + $0x24] sm:$0xf]
    %v198 = vld [vmem:[#allocation4 + $0x28] sm:$0xf]
    %v199 = vld [vmem:[#allocation4 + $0x2c] sm:$0xf]
    %v200 = vld [vmem:[#allocation4 + $0x30] sm:$0xf]
    %v201 = vld [vmem:[#allocation4 + $0x34] sm:$0xf]
    %v202 = vld [vmem:[#allocation4 + $0x38] sm:$0xf]
    %v203 = vld [vmem:[#allocation4 + $0x3c] sm:$0xf]
    %v204 = vld [vmem:[%s6] sm:$0x1]
    %v206 = vperm.slane %v204, 0
    %v224 = vunpack.c.l.b16 %v188
    %v225 = vunpack.c.l.b16 %v189
    %v226 = vunpack.c.l.b16 %v190
    %v227 = vunpack.c.l.b16 %v191
    %v228 = vunpack.c.l.b16 %v192
    %v229 = vunpack.c.l.b16 %v193
    %v230 = vunpack.c.l.b16 %v194
    %v231 = vunpack.c.l.b16 %v195
    %v232 = vunpack.c.l.b16 %v196
    %v233 = vunpack.c.l.b16 %v197
    %v234 = vunpack.c.l.b16 %v198
    %v235 = vunpack.c.l.b16 %v199
    %v236 = vunpack.c.l.b16 %v200
    %v237 = vunpack.c.l.b16 %v201
    %v238 = vunpack.c.l.b16 %v202
    %v239 = vunpack.c.l.b16 %v203
    %v240 = vpack.c.b16 %v225, %v224
    %v241 = vpack.c.b16 %v227, %v226
    %v242 = vpack.c.b16 %v229, %v228
    %v243 = vpack.c.b16 %v231, %v230
    %v244 = vpack.c.b16 %v233, %v232
    %v245 = vpack.c.b16 %v235, %v234
    %v246 = vpack.c.b16 %v237, %v236
    %v247 = vpack.c.b16 %v239, %v238
    %256 = vmatpush.bf16.msra.mxu0 %v247
    %257 = vmatpush.bf16.msra.mxu0 %v246
    %258 = vmatpush.bf16.msra.mxu0 %v245
    %259 = vmatpush.bf16.msra.mxu0 %v244
    %260 = vmatpush.bf16.msra.mxu0 %v243
    %261 = vmatpush.bf16.msra.mxu0 %v242
    %262 = vmatpush.bf16.msra.mxu0 %v241
    %263 = vmatpush.bf16.msra.mxu0 %v240
    %264 = vmatmul.bf16.gmra.mxu0 %v187
    %v265 = vpop.f32.mrf.mxu0
    %v266 = vadd.f32 %v206, %v265
    %v267 = vpop.f32.mrf.mxu0
    %v268 = vadd.f32 %v206, %v267
    %269 = vdwg.mxu0
    %270 = vxpose.xlu0.b32.start [1/16] %v266, 128
    %271 = vxpose.xlu0.b32.cont [2/16] %v268, 128
    %272 = vxpose.xlu0.b32.cont [3/16] 0.0, 128
    %273 = vxpose.xlu0.b32.cont [4/16] 0.0, 128
    %274 = vxpose.xlu0.b32.cont [5/16] 0.0, 128
    %275 = vxpose.xlu0.b32.cont [6/16] 0.0, 128
    %276 = vxpose.xlu0.b32.cont [7/16] 0.0, 128
    %277 = vxpose.xlu0.b32.cont [8/16] 0.0, 128
    %278 = vxpose.xlu0.b32.cont [9/16] 0.0, 128
    %279 = vxpose.xlu0.b32.cont [10/16] 0.0, 128
    %280 = vxpose.xlu0.b32.cont [11/16] 0.0, 128
    %281 = vxpose.xlu0.b32.cont [12/16] 0.0, 128
    %282 = vxpose.xlu0.b32.cont [13/16] 0.0, 128
    %283 = vxpose.xlu0.b32.cont [14/16] 0.0, 128
    %284 = vxpose.xlu0.b32.cont [15/16] 0.0, 128
    %285 = vxpose.xlu0.b32.end [16/16] 0.0, 128
    %v286 = vpop.trf.xlu0
    %v287 = vpop.trf.xlu0
    %v288 = vpop.trf.xlu0
    %v289 = vpop.trf.xlu0
    %v290 = vpop.trf.xlu0
    %v291 = vpop.trf.xlu0
    %v292 = vpop.trf.xlu0
    %v293 = vpop.trf.xlu0
    %v294 = vpop.trf.xlu0
    %v295 = vpop.trf.xlu0
    %v296 = vpop.trf.xlu0
    %v297 = vpop.trf.xlu0
    %v298 = vpop.trf.xlu0
    %v299 = vpop.trf.xlu0
    %v300 = vpop.trf.xlu0
    %v301 = vpop.trf.xlu0
    %vm302 = vcmask 122880
    %303 = vst.msk [vmem:[%s7] sm:$0x1] %vm302, %v286
    // Predicated region
    $region38: #{forward.1} parent=1 // pred_check
      _
    $region39: #{forward.1} parent=1 // pred_check_branch
      %305 = sbr.rel (0) target = $region41
    $region40: #{forward.1} parent=1 // pred_region
      _
    $region41: #{forward.1} parent=1 // pred_fallthru
      _
    // Predicated region
    $region42: #{forward.1} parent=1 // pred_check
      _
    $region43: #{forward.1} parent=1 // pred_check_branch
      %307 = sbr.rel (0) target = $region45
    $region44: #{forward.1} parent=1 // pred_region
      _
    $region45: #{forward.1} parent=1 // pred_fallthru
      _
    %308 = vsyncpa [#allocation3], 1
    %309 = vsyncpa [#allocation5], 1

</llo_original>
